<compile_context>
chip_gen: v7x
topology: tpu7x:2x2x1
jax: 0.10.0
libtpu: 0.0.40
codegen_flags: <defaults>
</compile_context>

<pallas_src>
import functools
import math

import jax
import jax.numpy as jnp
from jax import lax
from jax.experimental import pallas as pl
from jax.experimental.pallas import tpu as pltpu

# ---------------- synthetic config (small shapes) ----------------
BATCH = 8
DIFFMAP_HIDDEN = 32
PROTEIN_HIDDEN = 64
NUM_LAYERS = 2                    # num_hidden_layers for both encoders
PROJECTION_DIM = 16
PROJ_HIDDEN = 2 * PROJECTION_DIM  # ProjectionHead hidden_dim = projection_dim * 2
LN_EPS = 1e-5
LOGIT_SCALE_INIT = 2.6592         # CLIP default logit_scale_init_value
F_NORMALIZE_EPS = 1e-12           # torch.nn.functional.normalize default eps
LANES = 128                       # padded combined feature width (one lane tile)


# ---------------- math helpers (shared by kernel and JAX reference) ----------------
def _erf(x):
    # Abramowitz & Stegun 7.1.26 rational approximation (|err| < 1.5e-7).
    # Matches torch.nn.GELU() (exact erf form) to ~1e-7.
    p = 0.3275911
    a1, a2, a3, a4, a5 = (0.254829592, -0.284496736, 1.421413741,
                          -1.453152027, 1.061405429)
    s = jnp.where(x >= 0.0, 1.0, -1.0)
    ax = jnp.abs(x)
    t = 1.0 / (1.0 + p * ax)
    poly = ((((a5 * t + a4) * t + a3) * t + a2) * t + a1) * t
    return s * (1.0 - poly * jnp.exp(-ax * ax))


def _gelu(x):
    # gelu(0) == 0 exactly (leading x factor), so zero-padded lanes stay zero.
    return 0.5 * x * (1.0 + _erf(x * (1.0 / math.sqrt(2.0))))


def _layernorm(x, gamma, beta, eps):
    mu = jnp.mean(x, axis=-1, keepdims=True)
    var = jnp.mean((x - mu) ** 2, axis=-1, keepdims=True)
    return (x - mu) * lax.rsqrt(var + eps) * gamma + beta


def _masked_layernorm(x, maskdiv, gamma, beta, eps):
    # maskdiv = per-row mask / per-row valid-lane count.  Invalid lanes of x are
    # guaranteed zero; gamma/beta are zero there, so the output stays exactly 0.
    mu = jnp.sum(x * maskdiv, axis=-1, keepdims=True)
    var = jnp.sum(maskdiv * (x - mu) ** 2, axis=-1, keepdims=True)
    return (x - mu) * lax.rsqrt(var + eps) * gamma + beta


# ---------------- parameter packing (done once, outside the hot path) ----------------
def _row_dep(d_vec, p_vec, d_off, p_off, width, batch):
    """(2B, width): rows 0..B-1 carry d_vec at lanes [d_off,...), rows B..2B-1
    carry p_vec at lanes [p_off,...); everything else is zero."""
    d_vec = jnp.reshape(d_vec, (1, -1)).astype(jnp.float32)
    p_vec = jnp.reshape(p_vec, (1, -1)).astype(jnp.float32)
    out = jnp.zeros((2 * batch, width), jnp.float32)
    out = out.at[:batch, d_off:d_off + d_vec.shape[1]].set(
        jnp.broadcast_to(d_vec, (batch, d_vec.shape[1])))
    out = out.at[batch:, p_off:p_off + p_vec.shape[1]].set(
        jnp.broadcast_to(p_vec, (batch, p_vec.shape[1])))
    return out


def _block_diag(d_w, p_w, n_in, n_out, d_in, d_out, p_in, p_out):
    w = jnp.zeros((n_in, n_out), jnp.float32)
    w = w.at[d_in:d_in + d_w.shape[0], d_out:d_out + d_w.shape[1]].set(d_w)
    w = w.at[p_in:p_in + p_w.shape[0], p_out:p_out + p_w.shape[1]].set(p_w)
    return w


def pack_params(d_params, p_params, batch, lanes=LANES):
    """Pack both branches' params into one lane-padded f32 blob + static layout.

    The two branches are stacked: combined encoder feature space is
    [diffmap 0:dh | protein dh:dh+ph | zero-pad], combined projection hidden is
    [diffmap 0:hid | protein hid:2*hid | zero-pad]; the final Linear collapses
    both onto the same proj_dim lanes.
    """
    (d_ew, d_eb, d_eg, d_ebt, d_w1, d_b1, d_g1, d_bt1,
     d_w2, d_b2, d_g2, d_bt2) = d_params
    (p_ew, p_eb, p_eg, p_ebt, p_w1, p_b1, p_g1, p_bt1,
     p_w2, p_b2, p_g2, p_bt2) = p_params
    num_layers = d_ew.shape[0]
    dh, ph = d_ew.shape[1], p_ew.shape[1]
    hid = d_w1.shape[1]
    pd = d_w2.shape[1]
    assert p_ew.shape[0] == num_layers and p_w1.shape[1] == hid and p_w2.shape[1] == pd
    assert dh + ph <= lanes and 2 * hid <= lanes

    pieces, layout = [], {}

    def add(name, arr, ncols):
        r0 = sum(p.shape[0] for p in pieces)
        layout[name] = (r0, arr.shape[0], ncols)           # static Python ints
        pieces.append(jnp.pad(arr.astype(jnp.float32),
                              ((0, 0), (0, lanes - arr.shape[1]))))

    # Encoder: block-diagonal Linear weights + row-dependent biases / LN params.
    for l in range(num_layers):
        add(f"enc_w{l}", _block_diag(d_ew[l], p_ew[l], lanes, lanes, 0, 0, dh, dh), lanes)
    for l in range(num_layers):
        add(f"enc_b{l}", _row_dep(d_eb[l], p_eb[l], 0, dh, lanes, batch), lanes)
    add("enc_g",  _row_dep(d_eg,  p_eg,  0, dh, lanes, batch), lanes)
    add("enc_bt", _row_dep(d_ebt, p_ebt, 0, dh, lanes, batch), lanes)
    add("enc_md", _row_dep(jnp.full((1, dh), 1.0 / dh, jnp.float32),
                           jnp.full((1, ph), 1.0 / ph, jnp.float32),
                           0, dh, lanes, batch), lanes)

    # ProjectionHead first Linear + LayerNorm (still block-diagonal).
    add("w1", _block_diag(d_w1, p_w1, lanes, lanes, 0, 0, dh, hid), lanes)
    add("b1",  _row_dep(d_b1,  p_b1,  0, hid, lanes, batch), lanes)
    add("g1",  _row_dep(d_g1,  p_g1,  0, hid, lanes, batch), lanes)
    add("bt1", _row_dep(d_bt1, p_bt1, 0, hid, lanes, batch), lanes)
    add("md1", _row_dep(jnp.full((1, hid), 1.0 / hid, jnp.float32),
                        jnp.full((1, hid), 1.0 / hid, jnp.float32),
                        0, hid, lanes, batch), lanes)

    # Second Linear collapses both branches onto the same proj_dim lanes.
    w2 = jnp.zeros((lanes, pd), jnp.float32)
    w2 = w2.at[:hid].set(d_w2.astype(jnp.float32))
    w2 = w2.at[hid:2 * hid].set(p_w2.astype(jnp.float32))
    add("w2", w2, pd)
    add("b2",  _row_dep(d_b2,  p_b2,  0, 0, pd, batch), pd)
    add("g2",  _row_dep(d_g2,  p_g2,  0, 0, pd, batch), pd)
    add("bt2", _row_dep(d_bt2, p_bt2, 0, 0, pd, batch), pd)

    blob = jnp.concatenate(pieces, axis=0)                  # (704, 128) f32
    meta = dict(num_layers=num_layers, d_hidden=dh, p_hidden=ph, proj_dim=pd)
    return blob, layout, meta


# ---------------- fused Pallas kernel ----------------
def _fused_clip_kernel(scale_ref, x_ref, blob_ref, emb_ref, logits_ref,
                       *, layout, num_layers, eps):
    def piece(name):
        r0, nrows, ncols = layout[name]                     # all static
        return blob_ref[r0:r0 + nrows, 0:ncols]

    # Stacked branches: rows 0..B-1 = diffmap, rows B..2B-1 = protein.
    x = x_ref[...]

    # CLIPEncoder: stack of (Linear -> ReLU) with block-diagonal weights,
    # then per-row masked LayerNorm.
    for l in range(num_layers):
        x = jnp.maximum(
            jnp.dot(x, piece(f"enc_w{l}"), preferred_element_type=jnp.float32)
            + piece(f"enc_b{l}"), 0.0)
    x = _masked_layernorm(x, piece("enc_md"), piece("enc_g"), piece("enc_bt"), eps)

    # ProjectionHead: Linear -> LayerNorm -> GELU -> Dropout(eval) -> Linear -> LayerNorm
    h = jnp.dot(x, piece("w1"), preferred_element_type=jnp.float32) + piece("b1")
    h = _gelu(_masked_layernorm(h, piece("md1"), piece("g1"), piece("bt1"), eps))
    # TODO(synk): nn.Dropout(0.1) is identity in eval mode; training-mode RNG dropout omitted.
    e = jnp.dot(h, piece("w2"), preferred_element_type=jnp.float32) + piece("b2")
    e = _layernorm(e, piece("g2"), piece("bt2"), eps)

    # F.normalize(dim=-1): x / max(||x||_2, eps)  (all proj_dim lanes valid)
    nrm = jnp.sqrt(jnp.sum(e * e, axis=-1, keepdims=True))
    e = e / jnp.maximum(nrm, F_NORMALIZE_EPS)

    emb_ref[...] = e                                        # (2B, proj_dim) full store

    # logits = exp(logit_scale) * d_emb @ p_emb.T  (NT dot_general, no transpose)
    b = emb_ref.shape[0] // 2
    d_emb = e[0:b, :]
    p_emb = e[b:2 * b, :]
    raw = lax.dot_general(d_emb, p_emb, (((1,), (1,)), ((), ())),
                          preferred_element_type=jnp.float32)
    # exp of the raw SMEM scalar broadcast over the (B, B) tile -> EUP, ~free.
    scale = jnp.exp(jnp.full(raw.shape, scale_ref[0, 0], jnp.float32))
    logits_ref[...] = raw * scale


# ---------------- wrapper ----------------
def diffmap_protein_clip_forward(diffmap_values, protein_values,
                                 blob, layout, meta, logit_scale):
    batch = diffmap_values.shape[0]
    assert protein_values.shape[0] == batch
    dh, ph, pd = meta["d_hidden"], meta["p_hidden"], meta["proj_dim"]
    assert diffmap_values.shape[1] == dh and protein_values.shape[1] == ph

    # Stacked, lane-padded activations: one small input DMA instead of two,
    # layout plumbing only (no compute hoisted out of the kernel).
    x_comb = jnp.zeros((2 * batch, LANES), jnp.float32)
    x_comb = x_comb.at[:batch, 0:dh].set(diffmap_values.astype(jnp.float32))
    x_comb = x_comb.at[batch:, dh:dh + ph].set(protein_values.astype(jnp.float32))

    scale = jnp.asarray(logit_scale, jnp.float32).reshape(1, 1)  # raw; exp in-kernel

    kernel = functools.partial(_fused_clip_kernel, layout=layout,
                               num_layers=meta["num_layers"], eps=LN_EPS)
    smem = pl.BlockSpec(memory_space=pltpu.MemorySpace.SMEM)
    vmem = pl.BlockSpec(memory_space=pltpu.MemorySpace.VMEM)

    emb, logits = pl.pallas_call(
        kernel,
        out_shape=(jax.ShapeDtypeStruct((2 * batch, pd), jnp.float32),
                   jax.ShapeDtypeStruct((batch, batch), jnp.float32)),
        in_specs=[smem, vmem, vmem],
        out_specs=(vmem, vmem),
    )(scale, x_comb, blob)

    return {"logits_per_diffmap_protein": logits,
            "diffmap_embeds": emb[:batch],
            "protein_embeds": emb[batch:]}


# ---------------- deterministic parameter init ----------------
def _linear_init(key, fan_in, fan_out):
    # torch nn.Linear-style uniform(-1/sqrt(fan_in), 1/sqrt(fan_in)); weight stored (in, out).
    kw, kb = jax.random.split(key)
    bound = 1.0 / math.sqrt(fan_in)
    w = jax.random.uniform(kw, (fan_in, fan_out), jnp.float32, -bound, bound)
    b = jax.random.uniform(kb, (1, fan_out), jnp.float32, -bound, bound)
    return w, b


def make_branch_params(key, hidden, num_layers, proj_hidden, proj_dim):
    keys = jax.random.split(key, num_layers + 2)
    ws, bs = [], []
    for l in range(num_layers):
        w, b = _linear_init(keys[l], hidden, hidden)
        ws.append(w)
        bs.append(b)
    enc_w = jnp.stack(ws)                          # (L, hidden, hidden)
    enc_b = jnp.stack(bs)                          # (L, 1, hidden)
    enc_g = jnp.ones((1, hidden), jnp.float32)     # LayerNorm default weight
    enc_beta = jnp.zeros((1, hidden), jnp.float32)
    w1, b1 = _linear_init(keys[-2], hidden, proj_hidden)
    g1 = jnp.ones((1, proj_hidden), jnp.float32)
    beta1 = jnp.zeros((1, proj_hidden), jnp.float32)
    w2, b2 = _linear_init(keys[-1], proj_hidden, proj_dim)
    g2 = jnp.ones((1, proj_dim), jnp.float32)
    beta2 = jnp.zeros((1, proj_dim), jnp.float32)
    return (enc_w, enc_b, enc_g, enc_beta, w1, b1, g1, beta1, w2, b2, g2, beta2)


# ---------------- pure-JAX reference for sanity checking ----------------
def reference_branch(x, params):
    (enc_w, enc_b, enc_g, enc_beta, w1, b1, g1, beta1, w2, b2, g2, beta2) = params
    hi = jax.lax.Precision.HIGHEST
    for l in range(enc_w.shape[0]):
        x = jnp.maximum(jnp.dot(x, enc_w[l], precision=hi) + enc_b[l], 0.0)
    x = _layernorm(x, enc_g, enc_beta, LN_EPS)
    h = _layernorm(jnp.dot(x, w1, precision=hi) + b1, g1, beta1, LN_EPS)
    h = _gelu(h)
    e = _layernorm(jnp.dot(h, w2, precision=hi) + b2, g2, beta2, LN_EPS)
    n = jnp.sqrt(jnp.sum(e * e, axis=-1, keepdims=True))
    return e / jnp.maximum(n, F_NORMALIZE_EPS)


if __name__ == "__main__":
    key = jax.random.PRNGKey(0)
    k_d, k_p, k_dp, k_pp = jax.random.split(key, 4)

    diffmap_values = jax.random.normal(k_d, (BATCH, DIFFMAP_HIDDEN), jnp.float32)
    protein_values = jax.random.normal(k_p, (BATCH, PROTEIN_HIDDEN), jnp.float32)

    d_params = make_branch_params(k_dp, DIFFMAP_HIDDEN, NUM_LAYERS,
                                  PROJ_HIDDEN, PROJECTION_DIM)
    p_params = make_branch_params(k_pp, PROTEIN_HIDDEN, NUM_LAYERS,
                                  PROJ_HIDDEN, PROJECTION_DIM)
    logit_scale = jnp.array(LOGIT_SCALE_INIT, jnp.float32)

    # Pack params ONCE outside the hot path (single VMEM blob + static layout).
    blob, layout, meta = pack_params(d_params, p_params, BATCH)
    blob = jax.block_until_ready(blob)

    out = diffmap_protein_clip_forward(diffmap_values, protein_values,
                                       blob, layout, meta, logit_scale)
    jax.block_until_ready(out)

    # Sanity check vs a pure-JAX reference of the same math (per-branch, unpacked).
    ref_d = reference_branch(diffmap_values, d_params)
    ref_p = reference_branch(protein_values, p_params)
    ref_logits = jnp.exp(logit_scale) * jnp.dot(ref_d, ref_p.T,
                                                precision=jax.lax.Precision.HIGHEST)
    assert out["diffmap_embeds"].shape == (BATCH, PROJECTION_DIM)
    assert out["protein_embeds"].shape == (BATCH, PROJECTION_DIM)
    assert out["logits_per_diffmap_protein"].shape == (BATCH, BATCH)
    assert jnp.allclose(out["diffmap_embeds"], ref_d, atol=2e-3, rtol=2e-3)
    assert jnp.allclose(out["protein_embeds"], ref_p, atol=2e-3, rtol=2e-3)
    assert jnp.allclose(out["logits_per_diffmap_protein"], ref_logits,
                        atol=5e-3, rtol=5e-3)

    print("KERNEL_OK")
</pallas_src>

<mosaic_0001>
module attributes {stable_mosaic.version = 11 : i64} {
  func.func @_fused_clip_kernel(%arg0: memref<1x1xf32, #tpu.memory_space<smem>>, %arg1: memref<16x128xf32, #tpu.memory_space<vmem>>, %arg2: memref<704x128xf32, #tpu.memory_space<vmem>>, %arg3: memref<16x16xf32, #tpu.memory_space<vmem>>, %arg4: memref<8x8xf32, #tpu.memory_space<vmem>>) attributes {dimension_semantics = [], scalar_prefetch = 0 : i64, scratch_operands = 0 : i64, tpu.core_type = #tpu.core_type<tc>} {
    %c0 = arith.constant 0 : index
    %c0_0 = arith.constant 0 : index
    %0 = vector.load %arg1[%c0, %c0_0] : memref<16x128xf32, #tpu.memory_space<vmem>>, vector<16x128xf32>
    %c0_1 = arith.constant 0 : index
    %c0_2 = arith.constant 0 : index
    %1 = vector.load %arg2[%c0_1, %c0_2] : memref<704x128xf32, #tpu.memory_space<vmem>>, vector<128x128xf32>
    %cst = arith.constant dense<0.000000e+00> : vector<16x128xf32>
    %2 = tpu.matmul %0, %1, %cst {dimension_numbers = #tpu.dot_dimension_numbers<[1], [0], [0], [1], [0, 0, 1, 1], [], []>} : vector<16x128xf32>, vector<128x128xf32>, vector<16x128xf32> -> vector<16x128xf32>
    %c256 = arith.constant 256 : index
    %c0_3 = arith.constant 0 : index
    %3 = vector.load %arg2[%c256, %c0_3] : memref<704x128xf32, #tpu.memory_space<vmem>>, vector<16x128xf32>
    %4 = arith.addf %2, %3 : vector<16x128xf32>
    %cst_4 = arith.constant 0.000000e+00 : f32
    %5 = vector.broadcast %cst_4 : f32 to vector<16x128xf32>
    %6 = arith.maximumf %4, %5 : vector<16x128xf32>
    %c128 = arith.constant 128 : index
    %c0_5 = arith.constant 0 : index
    %7 = vector.load %arg2[%c128, %c0_5] : memref<704x128xf32, #tpu.memory_space<vmem>>, vector<128x128xf32>
    %cst_6 = arith.constant dense<0.000000e+00> : vector<16x128xf32>
    %8 = tpu.matmul %6, %7, %cst_6 {dimension_numbers = #tpu.dot_dimension_numbers<[1], [0], [0], [1], [0, 0, 1, 1], [], []>} : vector<16x128xf32>, vector<128x128xf32>, vector<16x128xf32> -> vector<16x128xf32>
    %c272 = arith.constant 272 : index
    %c0_7 = arith.constant 0 : index
    %9 = vector.load %arg2[%c272, %c0_7] : memref<704x128xf32, #tpu.memory_space<vmem>>, vector<16x128xf32>
    %10 = arith.addf %8, %9 : vector<16x128xf32>
    %cst_8 = arith.constant 0.000000e+00 : f32
    %11 = vector.broadcast %cst_8 : f32 to vector<16x128xf32>
    %12 = arith.maximumf %10, %11 : vector<16x128xf32>
    %c320 = arith.constant 320 : index
    %c0_9 = arith.constant 0 : index
    %13 = vector.load %arg2[%c320, %c0_9] : memref<704x128xf32, #tpu.memory_space<vmem>>, vector<16x128xf32>
    %c288 = arith.constant 288 : index
    %c0_10 = arith.constant 0 : index
    %14 = vector.load %arg2[%c288, %c0_10] : memref<704x128xf32, #tpu.memory_space<vmem>>, vector<16x128xf32>
    %c304 = arith.constant 304 : index
    %c0_11 = arith.constant 0 : index
    %15 = vector.load %arg2[%c304, %c0_11] : memref<704x128xf32, #tpu.memory_space<vmem>>, vector<16x128xf32>
    %16 = arith.mulf %12, %13 : vector<16x128xf32>
    %cst_12 = arith.constant dense<0.000000e+00> : vector<16xf32>
    %17 = vector.multi_reduction <add>, %16, %cst_12 [1] : vector<16x128xf32> to vector<16xf32>
    %18 = vector.shape_cast %17 : vector<16xf32> to vector<16x1xf32>
    %19 = vector.broadcast %18 : vector<16x1xf32> to vector<16x128xf32>
    %20 = arith.subf %12, %19 : vector<16x128xf32>
    %21 = arith.mulf %20, %20 : vector<16x128xf32>
    %22 = arith.mulf %13, %21 : vector<16x128xf32>
    %cst_13 = arith.constant dense<0.000000e+00> : vector<16xf32>
    %23 = vector.multi_reduction <add>, %22, %cst_13 [1] : vector<16x128xf32> to vector<16xf32>
    %24 = vector.shape_cast %23 : vector<16xf32> to vector<16x1xf32>
    %25 = vector.broadcast %18 : vector<16x1xf32> to vector<16x128xf32>
    %26 = arith.subf %12, %25 : vector<16x128xf32>
    %cst_14 = arith.constant 9.99999974E-6 : f32
    %27 = vector.broadcast %cst_14 : f32 to vector<16x1xf32>
    %28 = arith.addf %24, %27 : vector<16x1xf32>
    %29 = math.rsqrt %28 : vector<16x1xf32>
    %30 = vector.broadcast %29 : vector<16x1xf32> to vector<16x128xf32>
    %31 = arith.mulf %26, %30 : vector<16x128xf32>
    %32 = arith.mulf %31, %14 : vector<16x128xf32>
    %33 = arith.addf %32, %15 : vector<16x128xf32>
    %c336 = arith.constant 336 : index
    %c0_15 = arith.constant 0 : index
    %34 = vector.load %arg2[%c336, %c0_15] : memref<704x128xf32, #tpu.memory_space<vmem>>, vector<128x128xf32>
    %cst_16 = arith.constant dense<0.000000e+00> : vector<16x128xf32>
    %35 = tpu.matmul %33, %34, %cst_16 {dimension_numbers = #tpu.dot_dimension_numbers<[1], [0], [0], [1], [0, 0, 1, 1], [], []>} : vector<16x128xf32>, vector<128x128xf32>, vector<16x128xf32> -> vector<16x128xf32>
    %c464 = arith.constant 464 : index
    %c0_17 = arith.constant 0 : index
    %36 = vector.load %arg2[%c464, %c0_17] : memref<704x128xf32, #tpu.memory_space<vmem>>, vector<16x128xf32>
    %37 = arith.addf %35, %36 : vector<16x128xf32>
    %c512 = arith.constant 512 : index
    %c0_18 = arith.constant 0 : index
    %38 = vector.load %arg2[%c512, %c0_18] : memref<704x128xf32, #tpu.memory_space<vmem>>, vector<16x128xf32>
    %c480 = arith.constant 480 : index
    %c0_19 = arith.constant 0 : index
    %39 = vector.load %arg2[%c480, %c0_19] : memref<704x128xf32, #tpu.memory_space<vmem>>, vector<16x128xf32>
    %c496 = arith.constant 496 : index
    %c0_20 = arith.constant 0 : index
    %40 = vector.load %arg2[%c496, %c0_20] : memref<704x128xf32, #tpu.memory_space<vmem>>, vector<16x128xf32>
    %41 = arith.mulf %37, %38 : vector<16x128xf32>
    %cst_21 = arith.constant dense<0.000000e+00> : vector<16xf32>
    %42 = vector.multi_reduction <add>, %41, %cst_21 [1] : vector<16x128xf32> to vector<16xf32>
    %43 = vector.shape_cast %42 : vector<16xf32> to vector<16x1xf32>
    %44 = vector.broadcast %43 : vector<16x1xf32> to vector<16x128xf32>
    %45 = arith.subf %37, %44 : vector<16x128xf32>
    %46 = arith.mulf %45, %45 : vector<16x128xf32>
    %47 = arith.mulf %38, %46 : vector<16x128xf32>
    %cst_22 = arith.constant dense<0.000000e+00> : vector<16xf32>
    %48 = vector.multi_reduction <add>, %47, %cst_22 [1] : vector<16x128xf32> to vector<16xf32>
    %49 = vector.shape_cast %48 : vector<16xf32> to vector<16x1xf32>
    %50 = vector.broadcast %43 : vector<16x1xf32> to vector<16x128xf32>
    %51 = arith.subf %37, %50 : vector<16x128xf32>
    %cst_23 = arith.constant 9.99999974E-6 : f32
    %52 = vector.broadcast %cst_23 : f32 to vector<16x1xf32>
    %53 = arith.addf %49, %52 : vector<16x1xf32>
    %54 = math.rsqrt %53 : vector<16x1xf32>
    %55 = vector.broadcast %54 : vector<16x1xf32> to vector<16x128xf32>
    %56 = arith.mulf %51, %55 : vector<16x128xf32>
    %57 = arith.mulf %56, %39 : vector<16x128xf32>
    %58 = arith.addf %57, %40 : vector<16x128xf32>
    %cst_24 = arith.constant 5.000000e-01 : f32
    %59 = vector.broadcast %cst_24 : f32 to vector<16x128xf32>
    %60 = arith.mulf %59, %58 : vector<16x128xf32>
    %cst_25 = arith.constant 0.707106769 : f32
    %61 = vector.broadcast %cst_25 : f32 to vector<16x128xf32>
    %62 = arith.mulf %58, %61 : vector<16x128xf32>
    %cst_26 = arith.constant 0.000000e+00 : f32
    %63 = vector.broadcast %cst_26 : f32 to vector<16x128xf32>
    %64 = arith.cmpf oge, %62, %63 : vector<16x128xf32>
    %cst_27 = arith.constant 1.000000e+00 : f32
    %cst_28 = arith.constant -1.000000e+00 : f32
    %65 = vector.broadcast %cst_27 : f32 to vector<16x128xf32>
    %66 = vector.broadcast %cst_28 : f32 to vector<16x128xf32>
    %67 = arith.select %64, %65, %66 : vector<16x128xi1>, vector<16x128xf32>
    %68 = math.absf %62 : vector<16x128xf32>
    %cst_29 = arith.constant 0.327591091 : f32
    %69 = vector.broadcast %cst_29 : f32 to vector<16x128xf32>
    %70 = arith.mulf %69, %68 : vector<16x128xf32>
    %cst_30 = arith.constant 1.000000e+00 : f32
    %71 = vector.broadcast %cst_30 : f32 to vector<16x128xf32>
    %72 = arith.addf %71, %70 : vector<16x128xf32>
    %cst_31 = arith.constant 1.000000e+00 : f32
    %73 = vector.broadcast %cst_31 : f32 to vector<16x128xf32>
    %74 = arith.divf %73, %72 : vector<16x128xf32>
    %cst_32 = arith.constant 1.06140542 : f32
    %75 = vector.broadcast %cst_32 : f32 to vector<16x128xf32>
    %76 = arith.mulf %75, %74 : vector<16x128xf32>
    %cst_33 = arith.constant -1.45315206 : f32
    %77 = vector.broadcast %cst_33 : f32 to vector<16x128xf32>
    %78 = arith.addf %76, %77 : vector<16x128xf32>
    %79 = arith.mulf %78, %74 : vector<16x128xf32>
    %cst_34 = arith.constant 1.42141378 : f32
    %80 = vector.broadcast %cst_34 : f32 to vector<16x128xf32>
    %81 = arith.addf %79, %80 : vector<16x128xf32>
    %82 = arith.mulf %81, %74 : vector<16x128xf32>
    %cst_35 = arith.constant -0.284496725 : f32
    %83 = vector.broadcast %cst_35 : f32 to vector<16x128xf32>
    %84 = arith.addf %82, %83 : vector<16x128xf32>
    %85 = arith.mulf %84, %74 : vector<16x128xf32>
    %cst_36 = arith.constant 0.254829586 : f32
    %86 = vector.broadcast %cst_36 : f32 to vector<16x128xf32>
    %87 = arith.addf %85, %86 : vector<16x128xf32>
    %88 = arith.mulf %87, %74 : vector<16x128xf32>
    %cst_37 = arith.constant 0.000000e+00 : f32
    %89 = vector.broadcast %cst_37 : f32 to vector<16x128xf32>
    %90 = arith.subf %89, %68 : vector<16x128xf32>
    %91 = arith.mulf %90, %68 : vector<16x128xf32>
    %92 = math.exp %91 : vector<16x128xf32>
    %93 = arith.mulf %88, %92 : vector<16x128xf32>
    %cst_38 = arith.constant 1.000000e+00 : f32
    %94 = vector.broadcast %cst_38 : f32 to vector<16x128xf32>
    %95 = arith.subf %94, %93 : vector<16x128xf32>
    %96 = arith.mulf %67, %95 : vector<16x128xf32>
    %cst_39 = arith.constant 1.000000e+00 : f32
    %97 = vector.broadcast %cst_39 : f32 to vector<16x128xf32>
    %98 = arith.addf %97, %96 : vector<16x128xf32>
    %99 = arith.mulf %60, %98 : vector<16x128xf32>
    %c528 = arith.constant 528 : index
    %c0_40 = arith.constant 0 : index
    %100 = vector.load %arg2[%c528, %c0_40] : memref<704x128xf32, #tpu.memory_space<vmem>>, vector<128x16xf32>
    %cst_41 = arith.constant dense<0.000000e+00> : vector<16x16xf32>
    %101 = tpu.matmul %99, %100, %cst_41 {dimension_numbers = #tpu.dot_dimension_numbers<[1], [0], [0], [1], [0, 0, 1, 1], [], []>} : vector<16x128xf32>, vector<128x16xf32>, vector<16x16xf32> -> vector<16x16xf32>
    %c656 = arith.constant 656 : index
    %c0_42 = arith.constant 0 : index
    %102 = vector.load %arg2[%c656, %c0_42] : memref<704x128xf32, #tpu.memory_space<vmem>>, vector<16x16xf32>
    %103 = arith.addf %101, %102 : vector<16x16xf32>
    %c672 = arith.constant 672 : index
    %c0_43 = arith.constant 0 : index
    %104 = vector.load %arg2[%c672, %c0_43] : memref<704x128xf32, #tpu.memory_space<vmem>>, vector<16x16xf32>
    %c688 = arith.constant 688 : index
    %c0_44 = arith.constant 0 : index
    %105 = vector.load %arg2[%c688, %c0_44] : memref<704x128xf32, #tpu.memory_space<vmem>>, vector<16x16xf32>
    %cst_45 = arith.constant dense<0.000000e+00> : vector<16xf32>
    %106 = vector.multi_reduction <add>, %103, %cst_45 [1] : vector<16x16xf32> to vector<16xf32>
    %107 = vector.shape_cast %106 : vector<16xf32> to vector<16x1xf32>
    %cst_46 = arith.constant 1.600000e+01 : f32
    %108 = vector.broadcast %cst_46 : f32 to vector<16x1xf32>
    %109 = arith.divf %107, %108 : vector<16x1xf32>
    %110 = vector.broadcast %109 : vector<16x1xf32> to vector<16x16xf32>
    %111 = arith.subf %103, %110 : vector<16x16xf32>
    %112 = arith.mulf %111, %111 : vector<16x16xf32>
    %cst_47 = arith.constant dense<0.000000e+00> : vector<16xf32>
    %113 = vector.multi_reduction <add>, %112, %cst_47 [1] : vector<16x16xf32> to vector<16xf32>
    %114 = vector.shape_cast %113 : vector<16xf32> to vector<16x1xf32>
    %cst_48 = arith.constant 1.600000e+01 : f32
    %115 = vector.broadcast %cst_48 : f32 to vector<16x1xf32>
    %116 = arith.divf %114, %115 : vector<16x1xf32>
    %117 = vector.broadcast %109 : vector<16x1xf32> to vector<16x16xf32>
    %118 = arith.subf %103, %117 : vector<16x16xf32>
    %cst_49 = arith.constant 9.99999974E-6 : f32
    %119 = vector.broadcast %cst_49 : f32 to vector<16x1xf32>
    %120 = arith.addf %116, %119 : vector<16x1xf32>
    %121 = math.rsqrt %120 : vector<16x1xf32>
    %122 = vector.broadcast %121 : vector<16x1xf32> to vector<16x16xf32>
    %123 = arith.mulf %118, %122 : vector<16x16xf32>
    %124 = arith.mulf %123, %104 : vector<16x16xf32>
    %125 = arith.addf %124, %105 : vector<16x16xf32>
    %126 = arith.mulf %125, %125 : vector<16x16xf32>
    %cst_50 = arith.constant dense<0.000000e+00> : vector<16xf32>
    %127 = vector.multi_reduction <add>, %126, %cst_50 [1] : vector<16x16xf32> to vector<16xf32>
    %128 = vector.shape_cast %127 : vector<16xf32> to vector<16x1xf32>
    %129 = math.sqrt %128 : vector<16x1xf32>
    %cst_51 = arith.constant 9.99999996E-13 : f32
    %130 = vector.broadcast %cst_51 : f32 to vector<16x1xf32>
    %131 = arith.maximumf %129, %130 : vector<16x1xf32>
    %132 = vector.broadcast %131 : vector<16x1xf32> to vector<16x16xf32>
    %133 = arith.divf %125, %132 : vector<16x16xf32>
    %c0_52 = arith.constant 0 : index
    %c0_53 = arith.constant 0 : index
    %134 = vector.load %arg3[%c0_52, %c0_53] : memref<16x16xf32, #tpu.memory_space<vmem>>, vector<16x16xf32>
    tpu.vector_store %arg3[%c0_52, %c0_53], %133 {strides = array<i32>} : memref<16x16xf32, #tpu.memory_space<vmem>>, vector<16x16xf32>,
    %135 = vector.extract_strided_slice %133 {offsets = [0, 0], sizes = [8, 16], strides = [1, 1]} : vector<16x16xf32> to vector<8x16xf32>
    %136 = vector.extract_strided_slice %133 {offsets = [8, 0], sizes = [8, 16], strides = [1, 1]} : vector<16x16xf32> to vector<8x16xf32>
    %cst_54 = arith.constant dense<0.000000e+00> : vector<8x8xf32>
    %137 = tpu.matmul %135, %136, %cst_54 {dimension_numbers = #tpu.dot_dimension_numbers<[1], [1], [0], [0], [0, 0, 1, 0], [], []>} : vector<8x16xf32>, vector<8x16xf32>, vector<8x8xf32> -> vector<8x8xf32>
    %c0_55 = arith.constant 0 : index
    %c0_56 = arith.constant 0 : index
    %138 = memref.load %arg0[%c0_55, %c0_56] : memref<1x1xf32, #tpu.memory_space<smem>>
    %139 = vector.broadcast %138 : f32 to vector<8x8xf32>
    %140 = math.exp %139 : vector<8x8xf32>
    %141 = arith.mulf %137, %140 : vector<8x8xf32>
    %c0_57 = arith.constant 0 : index
    %c0_58 = arith.constant 0 : index
    %142 = vector.load %arg4[%c0_57, %c0_58] : memref<8x8xf32, #tpu.memory_space<vmem>>, vector<8x8xf32>
    tpu.vector_store %arg4[%c0_57, %c0_58], %141 {strides = array<i32>} : memref<8x8xf32, #tpu.memory_space<vmem>>, vector<8x8xf32>,
    return
  }
}

</mosaic_0001>

<llo_original>
// kernel: tpu_custom_call.1
$region0: #{tpu_custom_call.1}
  #allocation0 [shape = 'u32[]', space=smem, size = 0x4, offset = 0x4, fixed_abs, tag = 'smem constant byte address 0x4 - core index']
  #allocation1 [shape = 'u32[144,128]{1,0:T(1,128)}', space=vmem, size = 0x12000, scoped, tag = 'internal scratch']
  #allocation2 [shape = 'f32[1,1]{1,0:T(1,128)S(6)}', space=smem, size = 0x200, scoped, tag = 'scoped memory for tpu_custom_call.1']
  %s0 = inlined_call_operand.<no memory space> [shape: f32[1,1], index: 0, kind: input, shape index: {}]
  %s1 = inlined_call_operand.hbm [shape: f32[16,128], index: 1, kind: input, shape index: {}]
  %s2 = inlined_call_operand.hbm [shape: f32[704,128], index: 2, kind: input, shape index: {}]
  %s3 = inlined_call_operand.hbm [shape: f32[16,16], index: 3, kind: output, shape index: {0}]
  %s4 = inlined_call_operand.hbm [shape: f32[8,8], index: 4, kind: output, shape index: {1}]
  %5 = xla_tuple %s3, %s4
  %s6 = sld [smem:[#allocation0]]
  $region38: #{tpu_custom_call.1} parent=0
    _
  %s8 = ssub.s32 1, %s6
  %s9 = scalar_select 0, %s8, %s6
  %10 = sst [smem:[#allocation2]] %s0
  $region1: #{tpu_custom_call.1} parent=0
    #allocation3 [shape = 'u8[8192]{0}', space=vmem, size = 0x2000, scoped, tag = 'input window, operand 1, single buffered']
    #allocation4 [shape = 's32[1]{0}', space=sflag, size = 0x4, scoped, tag = 'scoped memory for tpu_custom_call.1']
    #allocation5 [shape = 's32[1]{0}', space=sflag, size = 0x4, scoped, tag = 'scoped memory for tpu_custom_call.1']
    #allocation6 [shape = 'u8[360448]{0}', space=vmem, size = 0x58000, scoped, tag = 'input window, operand 2, single buffered']
    #allocation7 [shape = 's32[1]{0}', space=sflag, size = 0x4, scoped, tag = 'scoped memory for tpu_custom_call.1']
    #allocation8 [shape = 'u8[8192]{0}', space=vmem, size = 0x2000, scoped, tag = 'output window, operand 0, single buffered']
    #allocation9 [shape = 'u8[4096]{0}', space=vmem, size = 0x1000, scoped, tag = 'output window, operand 1, single buffered']
    #allocation10 [shape = 's32[1]{0}', space=sflag, size = 0x4, scoped, tag = 'scoped memory for tpu_custom_call.1']
    %11 = vsyncpa [#allocation4], 0
    %12 = vsyncpa [#allocation7], 0
    %13 = vsyncpa [#allocation5], 0
    %14 = vsyncpa [#allocation10], 0
    // Predicated region
    $region2: #{tpu_custom_call.1} parent=1 // pred_check
      _
    $region3: #{tpu_custom_call.1} parent=1 // pred_check_branch
      %16 = sbr.rel (0) target = $region5
    $region4: #{tpu_custom_call.1} parent=1 // pred_region
      _
    $region5: #{tpu_custom_call.1} parent=1 // pred_fallthru
      _
    // Predicated region
    $region6: #{tpu_custom_call.1} parent=1 // pred_check
      _
    $region7: #{tpu_custom_call.1} parent=1 // pred_check_branch
      %18 = sbr.rel (0) target = $region9
    $region8: #{tpu_custom_call.1} parent=1 // pred_region
      %s20 = ssub.s32 256, 256
      %21 = vsyncadd [#allocation4], %s20
      %s22 = sshll.u32 [#allocation3], 4
      %s23 = int_to_ptr.vmem [resolvable:$true] %s22
      %28 = dma.hbm_to_vmem [thread:$0]  %s1, 256, %s23, [#allocation4], 128, 128, 8
    $region9: #{tpu_custom_call.1} parent=1 // pred_fallthru
      _
    // Predicated region
    $region10: #{tpu_custom_call.1} parent=1 // pred_check
      _
    $region11: #{tpu_custom_call.1} parent=1 // pred_check_branch
      %30 = sbr.rel (0) target = $region13
    $region12: #{tpu_custom_call.1} parent=1 // pred_region
      %s32 = ssub.s32 11264, 11264
      %33 = vsyncadd [#allocation7], %s32
      %s34 = sshll.u32 [#allocation6], 4
      %s35 = int_to_ptr.vmem [resolvable:$true] %s34
      %40 = dma.hbm_to_vmem [thread:$0]  %s2, 11264, %s35, [#allocation7], 128, 128, 8
    $region13: #{tpu_custom_call.1} parent=1 // pred_fallthru
      _
    // Predicated region
    $region14: #{tpu_custom_call.1} parent=1 // pred_check
      _
    $region15: #{tpu_custom_call.1} parent=1 // pred_check_branch
      %42 = sbr.rel (0) target = $region17
    $region16: #{tpu_custom_call.1} parent=1 // pred_region
      %43 = dma.done [#allocation4], 256
    $region17: #{tpu_custom_call.1} parent=1 // pred_fallthru
      _
    // Predicated region
    $region18: #{tpu_custom_call.1} parent=1 // pred_check
      _
    $region19: #{tpu_custom_call.1} parent=1 // pred_check_branch
      %45 = sbr.rel (0) target = $region21
    $region20: #{tpu_custom_call.1} parent=1 // pred_region
      %46 = dma.done [#allocation7], 11264
    $region21: #{tpu_custom_call.1} parent=1 // pred_fallthru
      _
    %v47 = vld [vmem:[#allocation3] sm:$0xff]
    %v48 = vld [vmem:[#allocation3 + $0x8] sm:$0xff]
    %v49 = vld [vmem:[#allocation6] sm:$0xff]
    %v50 = vld [vmem:[#allocation6 + $0x8] sm:$0xff]
    %v51 = vld [vmem:[#allocation6 + $0x10] sm:$0xff]
    %v52 = vld [vmem:[#allocation6 + $0x18] sm:$0xff]
    %v53 = vld [vmem:[#allocation6 + $0x20] sm:$0xff]
    %v54 = vld [vmem:[#allocation6 + $0x28] sm:$0xff]
    %v55 = vld [vmem:[#allocation6 + $0x30] sm:$0xff]
    %v56 = vld [vmem:[#allocation6 + $0x38] sm:$0xff]
    %v57 = vld [vmem:[#allocation6 + $0x40] sm:$0xff]
    %v58 = vld [vmem:[#allocation6 + $0x48] sm:$0xff]
    %v59 = vld [vmem:[#allocation6 + $0x50] sm:$0xff]
    %v60 = vld [vmem:[#allocation6 + $0x58] sm:$0xff]
    %v61 = vld [vmem:[#allocation6 + $0x60] sm:$0xff]
    %v62 = vld [vmem:[#allocation6 + $0x68] sm:$0xff]
    %v63 = vld [vmem:[#allocation6 + $0x70] sm:$0xff]
    %v64 = vld [vmem:[#allocation6 + $0x78] sm:$0xff]
    %v65 = vld [vmem:[#allocation6 + $0x100] sm:$0xff]
    %v66 = vld [vmem:[#allocation6 + $0x108] sm:$0xff]
    %67 = vmatprep.subr.mxu0 0.0
    %68 = vmatpush1.msra.mxu0 %v49
    %69 = vmatprep.subr.mxu0 0.0
    %70 = vmatpush1.msra.mxu0 %v50
    %71 = vmatprep.subr.mxu0 0.0
    %72 = vmatpush1.msra.mxu0 %v51
    %73 = vmatprep.subr.mxu0 0.0
    %74 = vmatpush1.msra.mxu0 %v52
    %75 = vmatprep.subr.mxu0 0.0
    %76 = vmatpush1.msra.mxu0 %v53
    %77 = vmatprep.subr.mxu0 0.0
    %78 = vmatpush1.msra.mxu0 %v54
    %79 = vmatprep.subr.mxu0 0.0
    %80 = vmatpush1.msra.mxu0 %v55
    %81 = vmatprep.subr.mxu0 0.0
    %82 = vmatpush1.msra.mxu0 %v56
    %83 = vmatprep.subr.mxu0 0.0
    %84 = vmatpush1.msra.mxu0 %v57
    %85 = vmatprep.subr.mxu0 0.0
    %86 = vmatpush1.msra.mxu0 %v58
    %87 = vmatprep.subr.mxu0 0.0
    %88 = vmatpush1.msra.mxu0 %v59
    %89 = vmatprep.subr.mxu0 0.0
    %90 = vmatpush1.msra.mxu0 %v60
    %91 = vmatprep.subr.mxu0 0.0
    %92 = vmatpush1.msra.mxu0 %v61
    %93 = vmatprep.subr.mxu0 0.0
    %94 = vmatpush1.msra.mxu0 %v62
    %95 = vmatprep.subr.mxu0 0.0
    %96 = vmatpush1.msra.mxu0 %v63
    %97 = vmatprep.subr.mxu0 0.0
    %98 = vmatpush1.msra.mxu0 %v64
    %99 = vmatprep.subr.mxu0 0.0
    %100 = vmatpush1.msra.mxu0 0.0
    %101 = vmatprep.subr.mxu0 0.0
    %102 = vmatpush1.msra.mxu0 0.0
    %103 = vmatprep.subr.mxu0 0.0
    %104 = vmatpush1.msra.mxu0 0.0
    %105 = vmatprep.subr.mxu0 0.0
    %106 = vmatpush1.msra.mxu0 0.0
    %107 = vmatprep.subr.mxu0 0.0
    %108 = vmatpush1.msra.mxu0 0.0
    %109 = vmatprep.subr.mxu0 0.0
    %110 = vmatpush1.msra.mxu0 0.0
    %111 = vmatprep.subr.mxu0 0.0
    %112 = vmatpush1.msra.mxu0 0.0
    %113 = vmatprep.subr.mxu0 0.0
    %114 = vmatpush1.msra.mxu0 0.0
    %115 = vmatprep.subr.mxu0 0.0
    %116 = vmatpush1.msra.mxu0 0.0
    %117 = vmatprep.subr.mxu0 0.0
    %118 = vmatpush1.msra.mxu0 0.0
    %119 = vmatprep.subr.mxu0 0.0
    %120 = vmatpush1.msra.mxu0 0.0
    %121 = vmatprep.subr.mxu0 0.0
    %122 = vmatpush1.msra.mxu0 0.0
    %123 = vmatprep.subr.mxu0 0.0
    %124 = vmatpush1.msra.mxu0 0.0
    %125 = vmatprep.subr.mxu0 0.0
    %126 = vmatpush1.msra.mxu0 0.0
    %127 = vmatprep.subr.mxu0 0.0
    %128 = vmatpush1.msra.mxu0 0.0
    %129 = vmatprep.subr.mxu0 0.0
    %130 = vmatpush1.msra.mxu0 0.0
    %131 = vmatprep.mubr.f32.mxu0 0.0
    %132 = vmatmul.mubr.f32.gmra.mrb[0].mxu0 %v47
    %v133 = vpop.f32.mrb[0].mxu0
    %v134 = vadd.f32 %v65, %v133
    %v135 = vpop.f32.mrb[0].mxu0
    %136 = vmatprep.mubr.f32.mxu0 0.0
    %137 = vmatmul.mubr.f32.gmra.mrb[0].mxu0 %v48
    %v138 = vpop.f32.mrb[0].mxu0
    %v139 = vadd.f32 %v66, %v138
    %v140 = vpop.f32.mrb[0].mxu0
    %141 = vdwg.mxu0
    %v142 = vmax.f32 %v134, 0.0
    %v143 = vmax.f32 %v139, 0.0
    %v144 = vld [vmem:[#allocation6 + $0x80] sm:$0xff]
    %v145 = vld [vmem:[#allocation6 + $0x88] sm:$0xff]
    %v146 = vld [vmem:[#allocation6 + $0x90] sm:$0xff]
    %v147 = vld [vmem:[#allocation6 + $0x98] sm:$0xff]
    %v148 = vld [vmem:[#allocation6 + $0xa0] sm:$0xff]
    %v149 = vld [vmem:[#allocation6 + $0xa8] sm:$0xff]
    %v150 = vld [vmem:[#allocation6 + $0xb0] sm:$0xff]
    %v151 = vld [vmem:[#allocation6 + $0xb8] sm:$0xff]
    %v152 = vld [vmem:[#allocation6 + $0xc0] sm:$0xff]
    %v153 = vld [vmem:[#allocation6 + $0xc8] sm:$0xff]
    %v154 = vld [vmem:[#allocation6 + $0xd0] sm:$0xff]
    %v155 = vld [vmem:[#allocation6 + $0xd8] sm:$0xff]
    %v156 = vld [vmem:[#allocation6 + $0xe0] sm:$0xff]
    %v157 = vld [vmem:[#allocation6 + $0xe8] sm:$0xff]
    %v158 = vld [vmem:[#allocation6 + $0xf0] sm:$0xff]
    %v159 = vld [vmem:[#allocation6 + $0xf8] sm:$0xff]
    %v160 = vld [vmem:[#allocation6 + $0x110] sm:$0xff]
    %v161 = vld [vmem:[#allocation6 + $0x118] sm:$0xff]
    %162 = vmatprep.subr.mxu0 0.0
    %163 = vmatpush1.msra.mxu0 %v144
    %164 = vmatprep.subr.mxu0 0.0
    %165 = vmatpush1.msra.mxu0 %v145
    %166 = vmatprep.subr.mxu0 0.0
    %167 = vmatpush1.msra.mxu0 %v146
    %168 = vmatprep.subr.mxu0 0.0
    %169 = vmatpush1.msra.mxu0 %v147
    %170 = vmatprep.subr.mxu0 0.0
    %171 = vmatpush1.msra.mxu0 %v148
    %172 = vmatprep.subr.mxu0 0.0
    %173 = vmatpush1.msra.mxu0 %v149
    %174 = vmatprep.subr.mxu0 0.0
    %175 = vmatpush1.msra.mxu0 %v150
    %176 = vmatprep.subr.mxu0 0.0
    %177 = vmatpush1.msra.mxu0 %v151
    %178 = vmatprep.subr.mxu0 0.0
    %179 = vmatpush1.msra.mxu0 %v152
    %180 = vmatprep.subr.mxu0 0.0
    %181 = vmatpush1.msra.mxu0 %v153
    %182 = vmatprep.subr.mxu0 0.0
    %183 = vmatpush1.msra.mxu0 %v154
    %184 = vmatprep.subr.mxu0 0.0
    %185 = vmatpush1.msra.mxu0 %v155
    %186 = vmatprep.subr.mxu0 0.0
    %187 = vmatpush1.msra.mxu0 %v156
    %188 = vmatprep.subr.mxu0 0.0
    %189 = vmatpush1.msra.mxu0 %v157
    %190 = vmatprep.subr.mxu0 0.0
    %191 = vmatpush1.msra.mxu0 %v158
    %192 = vmatprep.subr.mxu0 0.0
    %193 = vmatpush1.msra.mxu0 %v159
    %194 = vmatprep.subr.mxu0 0.0
    %195 = vmatpush1.msra.mxu0 0.0
    %196 = vmatprep.subr.mxu0 0.0
    %197 = vmatpush1.msra.mxu0 0.0
    %198 = vmatprep.subr.mxu0 0.0
    %199 = vmatpush1.msra.mxu0 0.0
    %200 = vmatprep.subr.mxu0 0.0
    %201 = vmatpush1.msra.mxu0 0.0
    %202 = vmatprep.subr.mxu0 0.0
    %203 = vmatpush1.msra.mxu0 0.0
    %204 = vmatprep.subr.mxu0 0.0
    %205 = vmatpush1.msra.mxu0 0.0
    %206 = vmatprep.subr.mxu0 0.0
    %207 = vmatpush1.msra.mxu0 0.0
    %208 = vmatprep.subr.mxu0 0.0
    %209 = vmatpush1.msra.mxu0 0.0
    %210 = vmatprep.subr.mxu0 0.0
    %211 = vmatpush1.msra.mxu0 0.0
    %212 = vmatprep.subr.mxu0 0.0
    %213 = vmatpush1.msra.mxu0 0.0
    %214 = vmatprep.subr.mxu0 0.0
    %215 = vmatpush1.msra.mxu0 0.0
    %216 = vmatprep.subr.mxu0 0.0
    %217 = vmatpush1.msra.mxu0 0.0
    %218 = vmatprep.subr.mxu0 0.0
    %219 = vmatpush1.msra.mxu0 0.0
    %220 = vmatprep.subr.mxu0 0.0
    %221 = vmatpush1.msra.mxu0 0.0
    %222 = vmatprep.subr.mxu0 0.0
    %223 = vmatpush1.msra.mxu0 0.0
    %224 = vmatprep.subr.mxu0 0.0
    %225 = vmatpush1.msra.mxu0 0.0
    %226 = vmatprep.mubr.f32.mxu0 0.0
    %227 = vmatmul.mubr.f32.gmra.mrb[0].mxu0 %v142
    %v228 = vpop.f32.mrb[0].mxu0
    %v229 = vadd.f32 %v160, %v228
    %v230 = vpop.f32.mrb[0].mxu0
    %231 = vmatprep.mubr.f32.mxu0 0.0
    %232 = vmatmul.mubr.f32.gmra.mrb[0].mxu0 %v143
    %v233 = vpop.f32.mrb[0].mxu0
    %v234 = vadd.f32 %v161, %v233
    %v235 = vpop.f32.mrb[0].mxu0
    %236 = vdwg.mxu0
    %v237 = vmax.f32 %v229, 0.0
    %v238 = vmax.f32 %v234, 0.0
    %v239 = vld [vmem:[#allocation6 + $0x140] sm:$0xff]
    %v240 = vld [vmem:[#allocation6 + $0x148] sm:$0xff]
    %v241 = vld [vmem:[#allocation6 + $0x120] sm:$0xff]
    %v242 = vld [vmem:[#allocation6 + $0x128] sm:$0xff]
    %v243 = vld [vmem:[#allocation6 + $0x130] sm:$0xff]
    %v244 = vld [vmem:[#allocation6 + $0x138] sm:$0xff]
    %v245 = vmul.f32 %v237, %v239
    %v246 = vmul.f32 %v238, %v240
    %247 = vadd.xlane.f32.xlu0 %v245
    %v248 = vpop.xlane.xlu0 %247
    %249 = vadd.xlane.f32.xlu0 %v246
    %v250 = vpop.xlane.xlu0 %249
    %v251 = vsub.f32 %v237, %v248
    %v252 = vsub.f32 %v238, %v250
    %v253 = vmul.f32 %v251, %v251
    %v254 = vmul.f32 %v252, %v252
    %v255 = vmul.f32 %v239, %v253
    %v256 = vmul.f32 %v240, %v254
    %257 = vadd.xlane.f32.xlu0 %v255
    %v258 = vpop.xlane.xlu0 %257
    %259 = vadd.xlane.f32.xlu0 %v256
    %v260 = vpop.xlane.xlu0 %259
    %v261 = vadd.f32 %v258, 1e-05
    %v262 = vadd.f32 %v260, 1e-05
    %v263 = vrsqrt.pop %v261
    %v264 = vrsqrt.pop %v262
    %v265 = vmul.f32 %v251, %v263
    %v266 = vmul.f32 %v252, %v264
    %v267 = vmul.f32 %v265, %v241
    %v268 = vmul.f32 %v266, %v242
    %v269 = vadd.f32 %v267, %v243
    %v270 = vadd.f32 %v268, %v244
    %v271 = vld [vmem:[#allocation6 + $0x150] sm:$0xff]
    %v272 = vld [vmem:[#allocation6 + $0x158] sm:$0xff]
    %v273 = vld [vmem:[#allocation6 + $0x160] sm:$0xff]
    %v274 = vld [vmem:[#allocation6 + $0x168] sm:$0xff]
    %v275 = vld [vmem:[#allocation6 + $0x170] sm:$0xff]
    %v276 = vld [vmem:[#allocation6 + $0x178] sm:$0xff]
    %v277 = vld [vmem:[#allocation6 + $0x180] sm:$0xff]
    %v278 = vld [vmem:[#allocation6 + $0x188] sm:$0xff]
    %v279 = vld [vmem:[#allocation6 + $0x190] sm:$0xff]
    %v280 = vld [vmem:[#allocation6 + $0x198] sm:$0xff]
    %v281 = vld [vmem:[#allocation6 + $0x1a0] sm:$0xff]
    %v282 = vld [vmem:[#allocation6 + $0x1a8] sm:$0xff]
    %v283 = vld [vmem:[#allocation6 + $0x1b0] sm:$0xff]
    %v284 = vld [vmem:[#allocation6 + $0x1b8] sm:$0xff]
    %v285 = vld [vmem:[#allocation6 + $0x1c0] sm:$0xff]
    %v286 = vld [vmem:[#allocation6 + $0x1c8] sm:$0xff]
    %v287 = vld [vmem:[#allocation6 + $0x1d0] sm:$0xff]
    %v288 = vld [vmem:[#allocation6 + $0x1d8] sm:$0xff]
    %289 = vmatprep.subr.mxu0 0.0
    %290 = vmatpush1.msra.mxu0 %v271
    %291 = vmatprep.subr.mxu0 0.0
    %292 = vmatpush1.msra.mxu0 %v272
    %293 = vmatprep.subr.mxu0 0.0
    %294 = vmatpush1.msra.mxu0 %v273
    %295 = vmatprep.subr.mxu0 0.0
    %296 = vmatpush1.msra.mxu0 %v274
    %297 = vmatprep.subr.mxu0 0.0
    %298 = vmatpush1.msra.mxu0 %v275
    %299 = vmatprep.subr.mxu0 0.0
    %300 = vmatpush1.msra.mxu0 %v276
    %301 = vmatprep.subr.mxu0 0.0
    %302 = vmatpush1.msra.mxu0 %v277
    %303 = vmatprep.subr.mxu0 0.0
    %304 = vmatpush1.msra.mxu0 %v278
    %305 = vmatprep.subr.mxu0 0.0
    %306 = vmatpush1.msra.mxu0 %v279
    %307 = vmatprep.subr.mxu0 0.0
    %308 = vmatpush1.msra.mxu0 %v280
    %309 = vmatprep.subr.mxu0 0.0
    %310 = vmatpush1.msra.mxu0 %v281
    %311 = vmatprep.subr.mxu0 0.0
    %312 = vmatpush1.msra.mxu0 %v282
    %313 = vmatprep.subr.mxu0 0.0
    %314 = vmatpush1.msra.mxu0 %v283
    %315 = vmatprep.subr.mxu0 0.0
    %316 = vmatpush1.msra.mxu0 %v284
    %317 = vmatprep.subr.mxu0 0.0
    %318 = vmatpush1.msra.mxu0 %v285
    %319 = vmatprep.subr.mxu0 0.0
    %320 = vmatpush1.msra.mxu0 %v286
    %321 = vmatprep.subr.mxu0 0.0
    %322 = vmatpush1.msra.mxu0 0.0
    %323 = vmatprep.subr.mxu0 0.0
    %324 = vmatpush1.msra.mxu0 0.0
    %325 = vmatprep.subr.mxu0 0.0
    %326 = vmatpush1.msra.mxu0 0.0
    %327 = vmatprep.subr.mxu0 0.0
    %328 = vmatpush1.msra.mxu0 0.0
    %329 = vmatprep.subr.mxu0 0.0
    %330 = vmatpush1.msra.mxu0 0.0
    %331 = vmatprep.subr.mxu0 0.0
    %332 = vmatpush1.msra.mxu0 0.0
    %333 = vmatprep.subr.mxu0 0.0
    %334 = vmatpush1.msra.mxu0 0.0
    %335 = vmatprep.subr.mxu0 0.0
    %336 = vmatpush1.msra.mxu0 0.0
    %337 = vmatprep.subr.mxu0 0.0
    %338 = vmatpush1.msra.mxu0 0.0
    %339 = vmatprep.subr.mxu0 0.0
    %340 = vmatpush1.msra.mxu0 0.0
    %341 = vmatprep.subr.mxu0 0.0
    %342 = vmatpush1.msra.mxu0 0.0
    %343 = vmatprep.subr.mxu0 0.0
    %344 = vmatpush1.msra.mxu0 0.0
    %345 = vmatprep.subr.mxu0 0.0
    %346 = vmatpush1.msra.mxu0 0.0
    %347 = vmatprep.subr.mxu0 0.0
    %348 = vmatpush1.msra.mxu0 0.0
    %349 = vmatprep.subr.mxu0 0.0
    %350 = vmatpush1.msra.mxu0 0.0
    %351 = vmatprep.subr.mxu0 0.0
    %352 = vmatpush1.msra.mxu0 0.0
    %353 = vmatprep.mubr.f32.mxu0 0.0
    %354 = vmatmul.mubr.f32.gmra.mrb[0].mxu0 %v269
    %v355 = vpop.f32.mrb[0].mxu0
    %v356 = vadd.f32 %v287, %v355
    %v357 = vpop.f32.mrb[0].mxu0
    %358 = vmatprep.mubr.f32.mxu0 0.0
    %359 = vmatmul.mubr.f32.gmra.mrb[0].mxu0 %v270
    %v360 = vpop.f32.mrb[0].mxu0
    %v361 = vadd.f32 %v288, %v360
    %v362 = vpop.f32.mrb[0].mxu0
    %363 = vdwg.mxu0
    %v364 = vld [vmem:[#allocation6 + $0x200] sm:$0xff]
    %v365 = vld [vmem:[#allocation6 + $0x208] sm:$0xff]
    %v366 = vld [vmem:[#allocation6 + $0x1e0] sm:$0xff]
    %v367 = vld [vmem:[#allocation6 + $0x1e8] sm:$0xff]
    %v368 = vld [vmem:[#allocation6 + $0x1f0] sm:$0xff]
    %v369 = vld [vmem:[#allocation6 + $0x1f8] sm:$0xff]
    %v370 = vmul.f32 %v356, %v364
    %v371 = vmul.f32 %v361, %v365
    %372 = vadd.xlane.f32.xlu0 %v370
    %v373 = vpop.xlane.xlu0 %372
    %374 = vadd.xlane.f32.xlu0 %v371
    %v375 = vpop.xlane.xlu0 %374
    %v376 = vsub.f32 %v356, %v373
    %v377 = vsub.f32 %v361, %v375
    %v378 = vmul.f32 %v376, %v376
    %v379 = vmul.f32 %v377, %v377
    %v380 = vmul.f32 %v364, %v378
    %v381 = vmul.f32 %v365, %v379
    %382 = vadd.xlane.f32.xlu0 %v380
    %v383 = vpop.xlane.xlu0 %382
    %384 = vadd.xlane.f32.xlu0 %v381
    %v385 = vpop.xlane.xlu0 %384
    %v386 = vadd.f32 %v383, 1e-05
    %v387 = vadd.f32 %v385, 1e-05
    %v388 = vrsqrt.pop %v386
    %v389 = vrsqrt.pop %v387
    %v390 = vmul.f32 %v376, %v388
    %v391 = vmul.f32 %v377, %v389
    %v392 = vmul.f32 %v390, %v366
    %v393 = vmul.f32 %v391, %v367
    %v394 = vadd.f32 %v392, %v368
    %v395 = vadd.f32 %v393, %v369
    %v396 = vmul.f32 %v394, 0.5
    %v397 = vmul.f32 %v395, 0.5
    %v398 = vmul.f32 %v394, 0.70710677
    %v399 = vmul.f32 %v395, 0.70710677
    %vm400 = vcmp.ge.f32.partialorder %v398, 0.0
    %vm401 = vcmp.ge.f32.partialorder %v399, 0.0
    %v402 = vsel %vm400, 1.0, -1.0
    %v403 = vsel %vm401, 1.0, -1.0
    %v404 = vand.u32 2147483647, %v398
    %v405 = vand.u32 2147483647, %v399
    %v406 = vmul.f32 %v404, 0.3275911
    %v407 = vmul.f32 %v405, 0.3275911
    %v408 = vadd.f32 %v406, 1.0
    %v409 = vadd.f32 %v407, 1.0
    %v410 = vrcp.pop %v408
    %v411 = vmul.f32 1.0, %v410
    %v412 = vrcp.pop %v409
    %v413 = vmul.f32 1.0, %v412
    %v414 = vmul.f32 %v411, 1.0614054
    %v415 = vmul.f32 %v413, 1.0614054
    %v416 = vadd.f32 %v414, -1.4531521
    %v417 = vadd.f32 %v415, -1.4531521
    %v418 = vmul.f32 %v416, %v411
    %v419 = vmul.f32 %v417, %v413
    %v420 = vadd.f32 %v418, 1.4214138
    %v421 = vadd.f32 %v419, 1.4214138
    %v422 = vmul.f32 %v420, %v411
    %v423 = vmul.f32 %v421, %v413
    %v424 = vadd.f32 %v422, -0.28449672
    %v425 = vadd.f32 %v423, -0.28449672
    %v426 = vmul.f32 %v424, %v411
    %v427 = vmul.f32 %v425, %v413
    %v428 = vadd.f32 %v426, 0.2548296
    %v429 = vadd.f32 %v427, 0.2548296
    %v430 = vmul.f32 %v428, %v411
    %v431 = vmul.f32 %v429, %v413
    %v432 = vsub.f32 0.0, %v404
    %v433 = vsub.f32 0.0, %v405
    %v434 = vmul.f32 %v432, %v404
    %v435 = vmul.f32 %v433, %v405
    %v436 = vmul.f32 %v434, 1.442695
    %v437 = vpow.pop %v436
    %v438 = vmul.f32 %v435, 1.442695
    %v439 = vpow.pop %v438
    %v440 = vmul.f32 %v430, %v437
    %v441 = vmul.f32 %v431, %v439
    %v442 = vsub.f32 1.0, %v440
    %v443 = vsub.f32 1.0, %v441
    %v444 = vmul.f32 %v402, %v442
    %v445 = vmul.f32 %v403, %v443
    %v446 = vadd.f32 %v444, 1.0
    %v447 = vadd.f32 %v445, 1.0
    %v448 = vmul.f32 %v396, %v446
    %v449 = vmul.f32 %v397, %v447
    %v450 = vld [vmem:[#allocation6 + $0x210] sm:$0xff]
    %v451 = vld [vmem:[#allocation6 + $0x218] sm:$0xff]
    %v452 = vld [vmem:[#allocation6 + $0x220] sm:$0xff]
    %v453 = vld [vmem:[#allocation6 + $0x228] sm:$0xff]
    %v454 = vld [vmem:[#allocation6 + $0x230] sm:$0xff]
    %v455 = vld [vmem:[#allocation6 + $0x238] sm:$0xff]
    %v456 = vld [vmem:[#allocation6 + $0x240] sm:$0xff]
    %v457 = vld [vmem:[#allocation6 + $0x248] sm:$0xff]
    %v458 = vld [vmem:[#allocation6 + $0x250] sm:$0xff]
    %v459 = vld [vmem:[#allocation6 + $0x258] sm:$0xff]
    %v460 = vld [vmem:[#allocation6 + $0x260] sm:$0xff]
    %v461 = vld [vmem:[#allocation6 + $0x268] sm:$0xff]
    %v462 = vld [vmem:[#allocation6 + $0x270] sm:$0xff]
    %v463 = vld [vmem:[#allocation6 + $0x278] sm:$0xff]
    %v464 = vld [vmem:[#allocation6 + $0x280] sm:$0xff]
    %v465 = vld [vmem:[#allocation6 + $0x288] sm:$0xff]
    %v466 = vld [vmem:[#allocation6 + $0x290] sm:$0xff]
    %v467 = vld [vmem:[#allocation6 + $0x298] sm:$0xff]
    %468 = vmatprep.subr.mxu0 0.0
    %469 = vmatpush1.msra.mxu0 %v450
    %470 = vmatprep.subr.mxu0 0.0
    %471 = vmatpush1.msra.mxu0 %v451
    %472 = vmatprep.subr.mxu0 0.0
    %473 = vmatpush1.msra.mxu0 %v452
    %474 = vmatprep.subr.mxu0 0.0
    %475 = vmatpush1.msra.mxu0 %v453
    %476 = vmatprep.subr.mxu0 0.0
    %477 = vmatpush1.msra.mxu0 %v454
    %478 = vmatprep.subr.mxu0 0.0
    %479 = vmatpush1.msra.mxu0 %v455
    %480 = vmatprep.subr.mxu0 0.0
    %481 = vmatpush1.msra.mxu0 %v456
    %482 = vmatprep.subr.mxu0 0.0
    %483 = vmatpush1.msra.mxu0 %v457
    %484 = vmatprep.subr.mxu0 0.0
    %485 = vmatpush1.msra.mxu0 %v458
    %486 = vmatprep.subr.mxu0 0.0
    %487 = vmatpush1.msra.mxu0 %v459
    %488 = vmatprep.subr.mxu0 0.0
    %489 = vmatpush1.msra.mxu0 %v460
    %490 = vmatprep.subr.mxu0 0.0
    %491 = vmatpush1.msra.mxu0 %v461
    %492 = vmatprep.subr.mxu0 0.0
    %493 = vmatpush1.msra.mxu0 %v462
    %494 = vmatprep.subr.mxu0 0.0
    %495 = vmatpush1.msra.mxu0 %v463
    %496 = vmatprep.subr.mxu0 0.0
    %497 = vmatpush1.msra.mxu0 %v464
    %498 = vmatprep.subr.mxu0 0.0
    %499 = vmatpush1.msra.mxu0 %v465
    %500 = vmatprep.subr.mxu0 0.0
    %501 = vmatpush1.msra.mxu0 0.0
    %502 = vmatprep.subr.mxu0 0.0
    %503 = vmatpush1.msra.mxu0 0.0
    %504 = vmatprep.subr.mxu0 0.0
    %505 = vmatpush1.msra.mxu0 0.0
    %506 = vmatprep.subr.mxu0 0.0
    %507 = vmatpush1.msra.mxu0 0.0
    %508 = vmatprep.subr.mxu0 0.0
    %509 = vmatpush1.msra.mxu0 0.0
    %510 = vmatprep.subr.mxu0 0.0
    %511 = vmatpush1.msra.mxu0 0.0
    %512 = vmatprep.subr.mxu0 0.0
    %513 = vmatpush1.msra.mxu0 0.0
    %514 = vmatprep.subr.mxu0 0.0
    %515 = vmatpush1.msra.mxu0 0.0
    %516 = vmatprep.subr.mxu0 0.0
    %517 = vmatpush1.msra.mxu0 0.0
    %518 = vmatprep.subr.mxu0 0.0
    %519 = vmatpush1.msra.mxu0 0.0
    %520 = vmatprep.subr.mxu0 0.0
    %521 = vmatpush1.msra.mxu0 0.0
    %522 = vmatprep.subr.mxu0 0.0
    %523 = vmatpush1.msra.mxu0 0.0
    %524 = vmatprep.subr.mxu0 0.0
    %525 = vmatpush1.msra.mxu0 0.0
    %526 = vmatprep.subr.mxu0 0.0
    %527 = vmatpush1.msra.mxu0 0.0
    %528 = vmatprep.subr.mxu0 0.0
    %529 = vmatpush1.msra.mxu0 0.0
    %530 = vmatprep.subr.mxu0 0.0
    %531 = vmatpush1.msra.mxu0 0.0
    %532 = vmatprep.mubr.f32.mxu0 0.0
    %533 = vmatmul.mubr.f32.gmra.mrb[0].mxu0 %v448
    %v534 = vpop.f32.mrb[0].mxu0
    %v535 = vadd.f32 %v466, %v534
    %v536 = vpop.f32.mrb[0].mxu0
    %537 = vmatprep.mubr.f32.mxu0 0.0
    %538 = vmatmul.mubr.f32.gmra.mrb[0].mxu0 %v449
    %v539 = vpop.f32.mrb[0].mxu0
    %v540 = vadd.f32 %v467, %v539
    %v541 = vpop.f32.mrb[0].mxu0
    %542 = vdwg.mxu0
    %v543 = vld [vmem:[#allocation6 + $0x2a0] sm:$0xff]
    %v544 = vld [vmem:[#allocation6 + $0x2a8] sm:$0xff]
    %v545 = vld [vmem:[#allocation6 + $0x2b0] sm:$0xff]
    %v546 = vld [vmem:[#allocation6 + $0x2b8] sm:$0xff]
    %vm547 = vcmask 130048
    %v548 = vsel %vm547, %v535, 0.0
    %549 = vadd.xlane.f32.xlu0 %v548
    %v550 = vpop.xlane.xlu0 %549
    %v551 = vsel %vm547, %v540, 0.0
    %552 = vadd.xlane.f32.xlu0 %v551
    %v553 = vpop.xlane.xlu0 %552
    %v554 = vrcp.pop 16.0
    %v555 = vmul.f32 %v550, %v554
    %v556 = vmul.f32 %v553, %v554
    %v557 = vsub.f32 %v535, %v555
    %v558 = vsub.f32 %v540, %v556
    %v559 = vmul.f32 %v557, %v557
    %v560 = vmul.f32 %v558, %v558
    %v561 = vsel %vm547, %v559, 0.0
    %562 = vadd.xlane.f32.xlu0 %v561
    %v563 = vpop.xlane.xlu0 %562
    %v564 = vsel %vm547, %v560, 0.0
    %565 = vadd.xlane.f32.xlu0 %v564
    %v566 = vpop.xlane.xlu0 %565
    %v567 = vmul.f32 %v563, %v554
    %v568 = vmul.f32 %v566, %v554
    %v569 = vadd.f32 %v567, 1e-05
    %v570 = vadd.f32 %v568, 1e-05
    %v571 = vrsqrt.pop %v569
    %v572 = vrsqrt.pop %v570
    %v573 = vmul.f32 %v557, %v571
    %v574 = vmul.f32 %v558, %v572
    %v575 = vmul.f32 %v573, %v543
    %v576 = vmul.f32 %v574, %v544
    %v577 = vadd.f32 %v575, %v545
    %v578 = vadd.f32 %v576, %v546
    %v579 = vmul.f32 %v577, %v577
    %v580 = vmul.f32 %v578, %v578
    %v581 = vsel %vm547, %v579, 0.0
    %582 = vadd.xlane.f32.xlu0 %v581
    %v583 = vpop.xlane.xlu0 %582
    %v584 = vsel %vm547, %v580, 0.0
    %585 = vadd.xlane.f32.xlu0 %v584
    %v586 = vpop.xlane.xlu0 %585
    %v587 = vrsqrt.pop %v583
    %v588 = vmul.f32 %v583, %v587
    %vm589 = vcmp.eq.f32.partialorder %v583, inf
    %v590 = vsel %vm589, %v583, %v588
    %vm591 = vcmp.eq.f32.partialorder %v583, 0.0
    %v592 = vand.u32 %v583, 2147483648
    %v593 = vsel %vm591, %v592, %v590
    %v594 = vrsqrt.pop %v586
    %v595 = vmul.f32 %v586, %v594
    %vm596 = vcmp.eq.f32.partialorder %v586, inf
    %v597 = vsel %vm596, %v586, %v595
    %vm598 = vcmp.eq.f32.partialorder %v586, 0.0
    %v599 = vand.u32 %v586, 2147483648
    %v600 = vsel %vm598, %v599, %v597
    %v601 = vmax.f32 %v593, 1e-12
    %v602 = vmax.f32 %v600, 1e-12
    %v603 = vrcp.pop %v601
    %v604 = vmul.f32 %v577, %v603
    %v605 = vrcp.pop %v602
    %v606 = vmul.f32 %v578, %v605
    %607 = vst.msk [vmem:[#allocation8] sm:$0xff] %vm547, %v604
    %608 = vst.msk [vmem:[#allocation8 + $0x8] sm:$0xff] %vm547, %v606
    %v610 = vsel %vm547, %v604, 0
    %v613 = vsel %vm547, %v606, 0
    %615 = vmatprep.subr.mxu0 0.0
    %616 = vmatpush1.xpose.msra.mxu0 %v613
    %617 = vmatprep.subr.mxu0 0.0
    %618 = vmatpush1.xpose.msra.mxu0 0.0
    %619 = vmatprep.subr.mxu0 0.0
    %620 = vmatpush1.xpose.msra.mxu0 0.0
    %621 = vmatprep.subr.mxu0 0.0
    %622 = vmatpush1.xpose.msra.mxu0 0.0
    %623 = vmatprep.subr.mxu0 0.0
    %624 = vmatpush1.xpose.msra.mxu0 0.0
    %625 = vmatprep.subr.mxu0 0.0
    %626 = vmatpush1.xpose.msra.mxu0 0.0
    %627 = vmatprep.subr.mxu0 0.0
    %628 = vmatpush1.xpose.msra.mxu0 0.0
    %629 = vmatprep.subr.mxu0 0.0
    %630 = vmatpush1.xpose.msra.mxu0 0.0
    %631 = vmatprep.subr.mxu0 0.0
    %632 = vmatpush1.xpose.msra.mxu0 0.0
    %633 = vmatprep.subr.mxu0 0.0
    %634 = vmatpush1.xpose.msra.mxu0 0.0
    %635 = vmatprep.subr.mxu0 0.0
    %636 = vmatpush1.xpose.msra.mxu0 0.0
    %637 = vmatprep.subr.mxu0 0.0
    %638 = vmatpush1.xpose.msra.mxu0 0.0
    %639 = vmatprep.subr.mxu0 0.0
    %640 = vmatpush1.xpose.msra.mxu0 0.0
    %641 = vmatprep.subr.mxu0 0.0
    %642 = vmatpush1.xpose.msra.mxu0 0.0
    %643 = vmatprep.subr.mxu0 0.0
    %644 = vmatpush1.xpose.msra.mxu0 0.0
    %645 = vmatprep.subr.mxu0 0.0
    %646 = vmatpush1.xpose.msra.mxu0 0.0
    %647 = vmatprep.subr.mxu0 0.0
    %648 = vmatpush1.xpose.msra.mxu0 0.0
    %649 = vmatprep.subr.mxu0 0.0
    %650 = vmatpush1.xpose.msra.mxu0 0.0
    %651 = vmatprep.subr.mxu0 0.0
    %652 = vmatpush1.xpose.msra.mxu0 0.0
    %653 = vmatprep.subr.mxu0 0.0
    %654 = vmatpush1.xpose.msra.mxu0 0.0
    %655 = vmatprep.subr.mxu0 0.0
    %656 = vmatpush1.xpose.msra.mxu0 0.0
    %657 = vmatprep.subr.mxu0 0.0
    %658 = vmatpush1.xpose.msra.mxu0 0.0
    %659 = vmatprep.subr.mxu0 0.0
    %660 = vmatpush1.xpose.msra.mxu0 0.0
    %661 = vmatprep.subr.mxu0 0.0
    %662 = vmatpush1.xpose.msra.mxu0 0.0
    %663 = vmatprep.subr.mxu0 0.0
    %664 = vmatpush1.xpose.msra.mxu0 0.0
    %665 = vmatprep.subr.mxu0 0.0
    %666 = vmatpush1.xpose.msra.mxu0 0.0
    %667 = vmatprep.subr.mxu0 0.0
    %668 = vmatpush1.xpose.msra.mxu0 0.0
    %669 = vmatprep.subr.mxu0 0.0
    %670 = vmatpush1.xpose.msra.mxu0 0.0
    %671 = vmatprep.subr.mxu0 0.0
    %672 = vmatpush1.xpose.msra.mxu0 0.0
    %673 = vmatprep.subr.mxu0 0.0
    %674 = vmatpush1.xpose.msra.mxu0 0.0
    %675 = vmatprep.subr.mxu0 0.0
    %676 = vmatpush1.xpose.msra.mxu0 0.0
    %677 = vmatprep.subr.mxu0 0.0
    %678 = vmatpush1.xpose.msra.mxu0 0.0
    %679 = vmatprep.mubr.f32.mxu0 0.0
    %680 = vmatmul.mubr.f32.gmra.mrb[0].mxu0 %v610
    %v681 = vpop.f32.mrb[0].mxu0
    %v682 = vadd.f32 0.0, %v681
    %v683 = vpop.f32.mrb[0].mxu0
    %684 = vdwg.mxu0
    %s685 = sld [smem:[#allocation2]]
    %v686 = vstv %s685
    %v687 = vmul.f32 %v686, 1.442695
    %v688 = vpow.pop %v687
    %v689 = vmul.f32 %v682, %v688
    %vm690 = vcmask 64512
    %691 = vst.msk [vmem:[#allocation9] sm:$0xff] %vm690, %v689
    // Predicated region
    $region22: #{tpu_custom_call.1} parent=1 // pred_check
      _
    $region23: #{tpu_custom_call.1} parent=1 // pred_check_branch
      %693 = sbr.rel (0) target = $region25
    $region24: #{tpu_custom_call.1} parent=1 // pred_region
      %s695 = ssub.s32 256, 256
      %696 = vsyncadd [#allocation5], %s695
      %s697 = sshll.u32 [#allocation8], 4
      %s698 = int_to_ptr.vmem [resolvable:$true] %s697
      %703 = dma.vmem_to_hbm [thread:$0]  %s698, 256, %s3, [#allocation5], 128, 128, 8
    $region25: #{tpu_custom_call.1} parent=1 // pred_fallthru
      _
    // Predicated region
    $region26: #{tpu_custom_call.1} parent=1 // pred_check
      _
    $region27: #{tpu_custom_call.1} parent=1 // pred_check_branch
      %705 = sbr.rel (0) target = $region29
    $region28: #{tpu_custom_call.1} parent=1 // pred_region
      %s707 = ssub.s32 128, 128
      %708 = vsyncadd [#allocation10], %s707
      %s710 = sshll.u32 [#allocation9], 4
      %s711 = int_to_ptr.vmem [resolvable:$true] %s710
      %713 = dma.vmem_to_hbm [thread:$0]  %s711, 128, %s4, [#allocation10]
    $region29: #{tpu_custom_call.1} parent=1 // pred_fallthru
      _
    // Predicated region
    $region30: #{tpu_custom_call.1} parent=1 // pred_check
      _
    $region31: #{tpu_custom_call.1} parent=1 // pred_check_branch
      %715 = sbr.rel (0) target = $region33
    $region32: #{tpu_custom_call.1} parent=1 // pred_region
      %716 = dma.done [#allocation5], 256
    $region33: #{tpu_custom_call.1} parent=1 // pred_fallthru
      _
    // Predicated region
    $region34: #{tpu_custom_call.1} parent=1 // pred_check
      _
    $region35: #{tpu_custom_call.1} parent=1 // pred_check_branch
      %718 = sbr.rel (0) target = $region37
    $region36: #{tpu_custom_call.1} parent=1 // pred_region
      %719 = dma.done [#allocation10], 128
    $region37: #{tpu_custom_call.1} parent=1 // pred_fallthru
      _
    %720 = vsyncpa [#allocation4], 1
    %721 = vsyncpa [#allocation7], 1
    %722 = vsyncpa [#allocation5], 1
    %723 = vsyncpa [#allocation10], 1

</llo_original>
